<compile_context>
chip_gen: v7x
topology: tpu7x:2x2x1
jax: 0.10.0
libtpu: 0.0.40
codegen_flags: <defaults>
</compile_context>

<pallas_src>
import math
import functools

import jax
import jax.numpy as jnp
from jax.experimental import pallas as pl
from jax.experimental.pallas import tpu as pltpu


MASK_VALUE = -0.7 * float(jnp.finfo(jnp.float32).max)   # big finite negative
_VMEM_LIMIT = 32 * 1024 * 1024                          # fits v5e/v6e/v7x budgets


def _round_up(x, m):
    return ((x + m - 1) // m) * m


def _sublane(dtype):
    return 16 if jnp.dtype(dtype) == jnp.dtype(jnp.bfloat16) else 8


# ----------------------------- tiled matmul --------------------------------

def _matmul_kernel(x_ref, w_ref, o_ref, acc_ref):
    @pl.when(pl.program_id(2) == 0)
    def _():
        acc_ref[...] = jnp.zeros_like(acc_ref)

    acc_ref[...] += jnp.dot(
        x_ref[...], w_ref[...], preferred_element_type=jnp.float32
    )

    @pl.when(pl.program_id(2) == pl.num_programs(2) - 1)
    def _():
        o_ref[...] = acc_ref[...].astype(o_ref.dtype)


def pallas_matmul(x, w, *, tm=256, tn=256, tk=512):
    """y = x @ w, tiled for the MXU with a K-axis f32 accumulator.

    Non-divisible dims are zero-padded to tile multiples (never fall back to a
    whole-dimension tile) and the result is sliced back.
    """
    M, K = x.shape
    K2, N = w.shape
    assert K == K2
    sub = _sublane(x.dtype)
    tm = min(tm, _round_up(M, sub))
    tn = min(tn, _round_up(N, 128))
    tk = min(tk, _round_up(K, 128))
    Mp, Kp, Np = _round_up(M, tm), _round_up(K, tk), _round_up(N, tn)
    if (Mp, Kp) != (M, K):
        x = jnp.pad(x, ((0, Mp - M), (0, Kp - K)))
    if (Kp, Np) != (K, N):
        w = jnp.pad(w, ((0, Kp - K), (0, Np - N)))

    out = pl.pallas_call(
        _matmul_kernel,
        out_shape=jax.ShapeDtypeStruct((Mp, Np), x.dtype),
        grid_spec=pltpu.PrefetchScalarGridSpec(
            num_scalar_prefetch=0,
            grid=(Mp // tm, Np // tn, Kp // tk),
            in_specs=[
                pl.BlockSpec((tm, tk), lambda i, j, k: (i, k)),
                pl.BlockSpec((tk, tn), lambda i, j, k: (k, j)),
            ],
            out_specs=pl.BlockSpec((tm, tn), lambda i, j, k: (i, j)),
            scratch_shapes=[pltpu.VMEM((tm, tn), jnp.float32)],
        ),
        compiler_params=pltpu.CompilerParams(
            dimension_semantics=("parallel", "parallel", "arbitrary"),
            vmem_limit_bytes=_VMEM_LIMIT,
        ),
    )(x, w)
    if (Mp, Np) != (M, N):
        out = out[:M, :N]
    return out


# ------------------------- flash attention kernel ---------------------------

def _flash_attn_kernel(sp_ref, q_ref, k_ref, v_ref, o_ref, m_sc, l_sc, acc_sc,
                       *, scale, n_rep, tq):
    # q/o blocks: (1, 1, n_rep*tq, D)  (rows ordered position-major, rep-minor)
    # k/v blocks: (1, 1, tkv, D)
    qi = pl.program_id(2)
    ki = pl.program_id(3)
    tkv = k_ref.shape[2]
    rows = q_ref.shape[2]                   # n_rep * tq
    sp = sp_ref[0]                          # dynamic start_pos (SMEM scalar)

    @pl.when(ki == 0)
    def _():
        m_sc[...] = jnp.full_like(m_sc, MASK_VALUE)
        l_sc[...] = jnp.zeros_like(l_sc)
        acc_sc[...] = jnp.zeros_like(acc_sc)

    # Skip KV blocks that lie entirely above the causal diagonal for this Q tile
    # (also skips everything past the current valid cache length).
    @pl.when(ki * tkv <= sp + (qi + 1) * tq - 1)
    def _():
        q = q_ref[0, 0]                                        # (rows, D)
        q = (q.astype(jnp.float32) * scale).astype(q.dtype)    # scale Q once
        k = k_ref[0, 0]                                        # (tkv, D)
        # QK^T contracting last dims (bf16 operands, f32 accumulation on the MXU)
        s = jax.lax.dot_general(
            q, k, (((1,), (1,)), ((), ())), preferred_element_type=jnp.float32
        )                                                      # (rows, tkv)

        # in-kernel causal mask (row // n_rep recovers the query position)
        row = jax.lax.broadcasted_iota(jnp.int32, (rows, tkv), 0)
        col = jax.lax.broadcasted_iota(jnp.int32, (rows, tkv), 1)
        q_pos = sp + qi * tq + row // n_rep
        k_pos = ki * tkv + col
        s = jnp.where(k_pos <= q_pos, s, MASK_VALUE)

        # online softmax update (all stats in f32)
        m_prev = m_sc[...]
        m_new = jnp.maximum(m_prev, jnp.max(s, axis=-1, keepdims=True))
        alpha = jnp.exp(m_prev - m_new)
        p = jnp.exp(s - m_new)
        l_sc[...] = alpha * l_sc[...] + jnp.sum(p, axis=-1, keepdims=True)
        v = v_ref[0, 0]
        acc_sc[...] = alpha * acc_sc[...] + jnp.dot(
            p.astype(v.dtype), v, preferred_element_type=jnp.float32
        )
        m_sc[...] = m_new

    @pl.when(ki == pl.num_programs(3) - 1)
    def _():
        l = l_sc[...]
        inv = pl.reciprocal(jnp.where(l > 0.0, l, 1.0), approx=True)   # EUP
        o_ref[0, 0] = (acc_sc[...] * inv).astype(o_ref.dtype)


def pallas_flash_attention(q, k, v, start_pos, *, n_rep, tq=256, tkv=512):
    """q: (B, Hkv, S*n_rep, D) with rows ordered (position-major, rep-minor);
    k/v: (B, Hkv, T, D) with T a multiple of the KV tile (cache sized at init)."""
    B, Hkv, rows_total, D = q.shape
    _, _, T, _ = k.shape
    S = rows_total // n_rep
    sub = _sublane(q.dtype)
    tq = min(tq, _round_up(S, sub))
    tkv = min(tkv, T)
    assert T % tkv == 0, "KV cache length must be a multiple of the KV tile"
    Sp = _round_up(S, tq)
    if Sp != S:
        # pad whole query positions at the end; padded rows are sliced off later
        q = jnp.pad(q, ((0, 0), (0, 0), (0, (Sp - S) * n_rep), (0, 0)))
    blk_rows = tq * n_rep
    scale = 1.0 / math.sqrt(D)
    grid = (B, Hkv, Sp // tq, T // tkv)

    def q_map(b, h, qi, ki, sp_ref):
        return (b, h, qi, 0)

    def kv_map(b, h, qi, ki, sp_ref):
        # Clamp to the last causally-needed block so skipped steps reuse the
        # previous block index -> no extra HBM DMA above the diagonal / past
        # the valid cache length.
        last_needed = (sp_ref[0] + (qi + 1) * tq - 1) // tkv
        return (b, h, jnp.minimum(ki, last_needed), 0)

    kernel = functools.partial(_flash_attn_kernel, scale=scale, n_rep=n_rep, tq=tq)
    return pl.pallas_call(
        kernel,
        out_shape=jax.ShapeDtypeStruct((B, Hkv, Sp * n_rep, D), q.dtype),
        grid_spec=pltpu.PrefetchScalarGridSpec(
            num_scalar_prefetch=1,
            grid=grid,
            in_specs=[
                pl.BlockSpec((1, 1, blk_rows, D), q_map),
                pl.BlockSpec((1, 1, tkv, D), kv_map),
                pl.BlockSpec((1, 1, tkv, D), kv_map),
            ],
            out_specs=pl.BlockSpec((1, 1, blk_rows, D), q_map),
            scratch_shapes=[
                pltpu.VMEM((blk_rows, 1), jnp.float32),   # running max
                pltpu.VMEM((blk_rows, 1), jnp.float32),   # running denom
                pltpu.VMEM((blk_rows, D), jnp.float32),   # output accumulator
            ],
        ),
        compiler_params=pltpu.CompilerParams(
            dimension_semantics=("parallel", "parallel", "parallel", "arbitrary"),
            vmem_limit_bytes=_VMEM_LIMIT,
        ),
    )(jnp.asarray(start_pos, jnp.int32).reshape(1), q, k, v)


# ------------------------------ JAX glue code -------------------------------

def precompute_freqs_cis(head_dim, max_seq_len, theta=10000.0):
    freqs = 1.0 / (theta ** (jnp.arange(0, head_dim, 2, dtype=jnp.float32) / head_dim))
    t = jnp.arange(max_seq_len, dtype=jnp.float32)
    freqs = jnp.outer(t, freqs)                       # (max_seq_len, head_dim//2)
    return jnp.cos(freqs), jnp.sin(freqs)


def apply_rotary_emb(xq, xk, cos, sin):
    # xq/xk: (B, S, H, D); cos/sin: (S, D//2).  f32 math, returned in input dtype.
    def rot(x):
        B, S, H, D = x.shape
        xr = x[..., 0::2].astype(jnp.float32)
        xi = x[..., 1::2].astype(jnp.float32)
        c = cos[None, :, None, :]
        s = sin[None, :, None, :]
        out_r = xr * c - xi * s
        out_i = xr * s + xi * c
        out = jnp.stack([out_r, out_i], axis=-1).reshape(B, S, H, D)
        return out.astype(x.dtype)
    return rot(xq), rot(xk)


class AttentionParams:
    def __init__(self, key, dim, n_heads, n_kv_heads, max_batch_size, max_seq_len,
                 dtype=jnp.bfloat16, kv_tile=512):
        self.dim = dim
        self.n_heads = n_heads
        self.n_kv_heads = n_kv_heads
        self.n_rep = n_heads // n_kv_heads
        self.head_dim = dim // n_heads
        self.dtype = dtype
        k1, k2, k3, k4 = jax.random.split(key, 4)
        std = 0.02

        def init(k, shape):
            # nn.Linear weights are (out, in); store transposed so y = x @ W_t.
            return (jax.random.normal(k, shape, jnp.float32) * std).T.astype(dtype)

        self.wq_t = init(k1, (n_heads * self.head_dim, dim))
        self.wk_t = init(k2, (n_kv_heads * self.head_dim, dim))
        self.wv_t = init(k3, (n_kv_heads * self.head_dim, dim))
        self.wo_t = init(k4, (dim, n_heads * self.head_dim))
        # fused QKV projection weight: one GEMM reads x once
        self.wqkv_t = jnp.concatenate([self.wq_t, self.wk_t, self.wv_t], axis=1)

        # KV cache in (B, Hkv, T, D) kernel layout, sized to a multiple of the
        # KV tile so attention never falls back to whole-cache blocks.
        self.kv_tile = min(kv_tile, _round_up(max_seq_len, _sublane(dtype)))
        self.cache_len = _round_up(max_seq_len, self.kv_tile)
        self.max_seq_len = max_seq_len
        self.cache_k = jnp.zeros(
            (max_batch_size, n_kv_heads, self.cache_len, self.head_dim), dtype)
        self.cache_v = jnp.zeros(
            (max_batch_size, n_kv_heads, self.cache_len, self.head_dim), dtype)


def attention_forward(p: AttentionParams, x, start_pos, cos, sin):
    bsz, seqlen, _ = x.shape
    x2d = x.reshape(bsz * seqlen, p.dim).astype(p.dtype)

    q_dim = p.n_heads * p.head_dim
    kv_dim = p.n_kv_heads * p.head_dim

    # fused Q/K/V projection (single tiled GEMM, bf16 in / f32 accumulate)
    qkv = pallas_matmul(x2d, p.wqkv_t)
    xq = qkv[:, :q_dim].reshape(bsz, seqlen, p.n_heads, p.head_dim)
    xk = qkv[:, q_dim:q_dim + kv_dim].reshape(bsz, seqlen, p.n_kv_heads, p.head_dim)
    xv = qkv[:, q_dim + kv_dim:].reshape(bsz, seqlen, p.n_kv_heads, p.head_dim)

    cos_s = jax.lax.dynamic_slice_in_dim(cos, start_pos, seqlen, axis=0)
    sin_s = jax.lax.dynamic_slice_in_dim(sin, start_pos, seqlen, axis=0)
    xq, xk = apply_rotary_emb(xq, xk, cos_s, sin_s)

    # KV-cache update: only the new (B, Hkv, S, D) chunk is transposed, the
    # cache itself already lives in kernel layout.
    xk_t = jnp.transpose(xk, (0, 2, 1, 3)).astype(p.dtype)
    xv_t = jnp.transpose(xv, (0, 2, 1, 3)).astype(p.dtype)
    cache_k = jax.lax.dynamic_update_slice(p.cache_k, xk_t, (0, 0, start_pos, 0))
    cache_v = jax.lax.dynamic_update_slice(p.cache_v, xv_t, (0, 0, start_pos, 0))

    # fold the n_rep query heads of each KV group into the row axis
    # (rows ordered position-major, rep-minor)
    q_m = (xq.reshape(bsz, seqlen, p.n_kv_heads, p.n_rep, p.head_dim)
             .transpose(0, 2, 1, 3, 4)
             .reshape(bsz, p.n_kv_heads, seqlen * p.n_rep, p.head_dim)
             .astype(p.dtype))

    out_m = pallas_flash_attention(q_m, cache_k[:bsz], cache_v[:bsz], start_pos,
                                   n_rep=p.n_rep, tkv=p.kv_tile)
    Sp = out_m.shape[2] // p.n_rep
    out2d = (out_m.reshape(bsz, p.n_kv_heads, Sp, p.n_rep, p.head_dim)[:, :, :seqlen]
                 .transpose(0, 2, 1, 3, 4)
                 .reshape(bsz * seqlen, p.n_heads * p.head_dim))
    # TODO(synk): for production head_dim>=128 the output block is lane-dense;
    # for tiny head_dim fold heads into the lane axis of the out_spec instead.

    y = pallas_matmul(out2d, p.wo_t).reshape(bsz, seqlen, p.dim)
    return y.astype(x.dtype), cache_k, cache_v


# ---------------------------- reference (plain JAX) --------------------------

def repeat_kv_ref(x, n_rep):
    if n_rep == 1:
        return x
    bs, slen, n_kv, hd = x.shape
    return jnp.broadcast_to(
        x[:, :, :, None, :], (bs, slen, n_kv, n_rep, hd)
    ).reshape(bs, slen, n_kv * n_rep, hd)


def attention_reference(p, x, start_pos, cos, sin, mask):
    f32 = jnp.float32
    bsz, seqlen, _ = x.shape
    xf = x.astype(f32)
    xq = (xf @ p.wq_t.astype(f32)).reshape(bsz, seqlen, p.n_heads, p.head_dim)
    xk = (xf @ p.wk_t.astype(f32)).reshape(bsz, seqlen, p.n_kv_heads, p.head_dim)
    xv = (xf @ p.wv_t.astype(f32)).reshape(bsz, seqlen, p.n_kv_heads, p.head_dim)
    xq, xk = apply_rotary_emb(xq, xk, cos[start_pos:start_pos + seqlen],
                              sin[start_pos:start_pos + seqlen])
    cache_k = jnp.zeros((bsz, p.cache_len, p.n_kv_heads, p.head_dim), f32)
    cache_v = jnp.zeros((bsz, p.cache_len, p.n_kv_heads, p.head_dim), f32)
    cache_k = jax.lax.dynamic_update_slice(cache_k, xk, (0, start_pos, 0, 0))
    cache_v = jax.lax.dynamic_update_slice(cache_v, xv, (0, start_pos, 0, 0))
    keys = repeat_kv_ref(cache_k[:, :start_pos + seqlen], p.n_rep)
    values = repeat_kv_ref(cache_v[:, :start_pos + seqlen], p.n_rep)
    q = jnp.transpose(xq, (0, 2, 1, 3))
    k = jnp.transpose(keys, (0, 2, 1, 3))
    v = jnp.transpose(values, (0, 2, 1, 3))
    scores = jnp.einsum("bhsd,bhtd->bhst", q, k) / math.sqrt(p.head_dim) + mask
    probs = jax.nn.softmax(scores, axis=-1)
    out = jnp.einsum("bhst,bhtd->bhsd", probs, v)
    out = jnp.transpose(out, (0, 2, 1, 3)).reshape(bsz, seqlen, -1)
    return out @ p.wo_t.astype(f32)


# ---------------------------------- main ------------------------------------

if __name__ == "__main__":
    # small ModelArgs-equivalent config
    dim = 32
    n_heads = 4
    n_kv_heads = 2          # GQA: n_rep = 2
    max_batch_size = 2
    max_seq_len = 16
    bsz, seqlen = 2, 8
    start_pos = 0

    key = jax.random.PRNGKey(0)
    kp, kx = jax.random.split(key)
    params = AttentionParams(kp, dim, n_heads, n_kv_heads, max_batch_size, max_seq_len)

    x = jax.random.normal(kx, (bsz, seqlen, dim), jnp.float32)
    cos, sin = precompute_freqs_cis(params.head_dim, max_seq_len)

    out, _, _ = attention_forward(params, x, start_pos, cos, sin)
    out = jax.block_until_ready(out)

    # reference uses the explicit additive causal mask (same semantics as the
    # in-kernel index comparison against start_pos).
    mask = jnp.full((seqlen, start_pos + seqlen), float("-inf"), jnp.float32)
    mask = jnp.triu(mask, k=1 + start_pos)
    ref = attention_reference(params, x, start_pos, cos, sin, mask)

    assert out.shape == (bsz, seqlen, dim)
    max_err = float(jnp.max(jnp.abs(out - ref)))
    assert jnp.allclose(out, ref, atol=2e-2, rtol=2e-2), (
        f"mismatch vs reference, max abs err {max_err}")

    print("KERNEL_OK")
</pallas_src>

<mosaic_0001>
module attributes {stable_mosaic.version = 11 : i64} {
  func.func @_matmul_kernel(%arg0: i32, %arg1: i32, %arg2: i32, %arg3: memref<16x128xbf16, #tpu.memory_space<vmem>>, %arg4: memref<128x128xbf16, #tpu.memory_space<vmem>>, %arg5: memref<16x128xbf16, #tpu.memory_space<vmem>>, %arg6: memref<16x128xf32, #tpu.memory_space<vmem>>) attributes {dimension_semantics = [#tpu.dimension_semantics<parallel>, #tpu.dimension_semantics<parallel>, #tpu.dimension_semantics<arbitrary>], iteration_bounds = array<i64: 1, 1, 1>, scalar_prefetch = 0 : i64, scratch_operands = 1 : i64, tpu.core_type = #tpu.core_type<tc>, window_params = [{transform_indices = @transform_0, window_bounds = array<i64: 16, 128>}, {transform_indices = @transform_1, window_bounds = array<i64: 128, 128>}, {transform_indices = @transform_2, window_bounds = array<i64: 16, 128>}]} {
    %c0_i32 = arith.constant 0 : i32
    %0 = arith.cmpi eq, %arg2, %c0_i32 : i32
    %1 = arith.extui %0 : i1 to i32
    %c0_i32_0 = arith.constant 0 : i32
    %2 = arith.cmpi ne, %1, %c0_i32_0 : i32
    scf.if %2 {
      %cst_10 = arith.constant 0.000000e+00 : f32
      %12 = vector.broadcast %cst_10 : f32 to vector<16x128xf32>
      %c0_11 = arith.constant 0 : index
      %c0_12 = arith.constant 0 : index
      %13 = vector.load %arg6[%c0_11, %c0_12] : memref<16x128xf32, #tpu.memory_space<vmem>>, vector<16x128xf32>
      tpu.vector_store %arg6[%c0_11, %c0_12], %12 {strides = array<i32>} : memref<16x128xf32, #tpu.memory_space<vmem>>, vector<16x128xf32>,
    } else {
    }
    %c0 = arith.constant 0 : index
    %c0_1 = arith.constant 0 : index
    %3 = vector.load %arg6[%c0, %c0_1] : memref<16x128xf32, #tpu.memory_space<vmem>>, vector<16x128xf32>
    %c0_2 = arith.constant 0 : index
    %c0_3 = arith.constant 0 : index
    %4 = vector.load %arg3[%c0_2, %c0_3] : memref<16x128xbf16, #tpu.memory_space<vmem>>, vector<16x128xbf16>
    %c0_4 = arith.constant 0 : index
    %c0_5 = arith.constant 0 : index
    %5 = vector.load %arg4[%c0_4, %c0_5] : memref<128x128xbf16, #tpu.memory_space<vmem>>, vector<128x128xbf16>
    %cst = arith.constant dense<0.000000e+00> : vector<16x128xf32>
    %6 = tpu.matmul %4, %5, %cst {dimension_numbers = #tpu.dot_dimension_numbers<[1], [0], [0], [1], [0, 0, 1, 1], [], []>} : vector<16x128xbf16>, vector<128x128xbf16>, vector<16x128xf32> -> vector<16x128xf32>
    %7 = arith.addf %3, %6 : vector<16x128xf32>
    %c0_6 = arith.constant 0 : index
    %c0_7 = arith.constant 0 : index
    %8 = vector.load %arg6[%c0_6, %c0_7] : memref<16x128xf32, #tpu.memory_space<vmem>>, vector<16x128xf32>
    tpu.vector_store %arg6[%c0_6, %c0_7], %7 {strides = array<i32>} : memref<16x128xf32, #tpu.memory_space<vmem>>, vector<16x128xf32>,
    %c0_i32_8 = arith.constant 0 : i32
    %9 = arith.cmpi eq, %arg2, %c0_i32_8 : i32
    %10 = arith.extui %9 : i1 to i32
    %c0_i32_9 = arith.constant 0 : i32
    %11 = arith.cmpi ne, %10, %c0_i32_9 : i32
    scf.if %11 {
      %c0_10 = arith.constant 0 : index
      %c0_11 = arith.constant 0 : index
      %12 = vector.load %arg6[%c0_10, %c0_11] : memref<16x128xf32, #tpu.memory_space<vmem>>, vector<16x128xf32>
      %13 = arith.truncf %12 : vector<16x128xf32> to vector<16x128xbf16>
      %c0_12 = arith.constant 0 : index
      %c0_13 = arith.constant 0 : index
      %14 = vector.load %arg5[%c0_12, %c0_13] : memref<16x128xbf16, #tpu.memory_space<vmem>>, vector<16x128xbf16>
      tpu.vector_store %arg5[%c0_12, %c0_13], %13 {strides = array<i32>} : memref<16x128xbf16, #tpu.memory_space<vmem>>, vector<16x128xbf16>,
    } else {
    }
    return
  }
  func.func @transform_0(%arg0: i32, %arg1: i32, %arg2: i32) -> (i32, i32) {
    %c0_i32 = arith.constant 0 : i32
    return %arg0, %arg2 : i32, i32
  }
  func.func @transform_1(%arg0: i32, %arg1: i32, %arg2: i32) -> (i32, i32) {
    %c0_i32 = arith.constant 0 : i32
    return %arg2, %arg1 : i32, i32
  }
  func.func @transform_2(%arg0: i32, %arg1: i32, %arg2: i32) -> (i32, i32) {
    %c0_i32 = arith.constant 0 : i32
    return %arg0, %arg1 : i32, i32
  }
}

</mosaic_0001>

<llo_original>
// kernel: tpu_custom_call.1
$region0: #{tpu_custom_call.1}
  #allocation0 [shape = 'u32[]', space=smem, size = 0x4, offset = 0x4, fixed_abs, tag = 'smem constant byte address 0x4 - core index']
  #allocation1 [shape = 'u32[144,128]{1,0:T(1,128)}', space=vmem, size = 0x12000, scoped, tag = 'internal scratch']
  #allocation2 [shape = 'f32[16,128]{1,0:T(8,128)}', space=vmem, size = 0x2000, scoped, tag = 'scratch operand']
  %s0 = inlined_call_operand.hbm [shape: bf16[16,128], index: 0, kind: input, shape index: {}]
  %s1 = inlined_call_operand.hbm [shape: bf16[128,128], index: 1, kind: input, shape index: {}]
  %s2 = inlined_call_operand.hbm [shape: bf16[16,128], index: 2, kind: output, shape index: {}]
  %s3 = sld [smem:[#allocation0]]
  $region34: #{tpu_custom_call.1} parent=0
    _
  %s5 = ssub.s32 1, %s3
  %s6 = scalar_select 0, %s5, %s3
  $region1: #{tpu_custom_call.1} parent=0
    #allocation3 [shape = 'u8[4096]{0}', space=vmem, size = 0x1000, scoped, tag = 'input window, operand 0, single buffered']
    #allocation4 [shape = 's32[1]{0}', space=sflag, size = 0x4, scoped, tag = 'scoped memory for tpu_custom_call.1']
    #allocation5 [shape = 's32[1]{0}', space=sflag, size = 0x4, scoped, tag = 'scoped memory for tpu_custom_call.1']
    #allocation6 [shape = 'u8[32768]{0}', space=vmem, size = 0x8000, scoped, tag = 'input window, operand 1, single buffered']
    #allocation7 [shape = 's32[1]{0}', space=sflag, size = 0x4, scoped, tag = 'scoped memory for tpu_custom_call.1']
    #allocation8 [shape = 'u8[4096]{0}', space=vmem, size = 0x1000, scoped, tag = 'output window, operand 0, single buffered']
    %7 = vsyncpa [#allocation4], 0
    %8 = vsyncpa [#allocation7], 0
    %9 = vsyncpa [#allocation5], 0
    // Predicated region
    $region2: #{tpu_custom_call.1} parent=1 // pred_check
      _
    $region3: #{tpu_custom_call.1} parent=1 // pred_check_branch
      %11 = sbr.rel (0) target = $region5
    $region4: #{tpu_custom_call.1} parent=1 // pred_region
      %s13 = ssub.s32 128, 128
      %14 = vsyncadd [#allocation4], %s13
      %s15 = sshll.u32 [#allocation3], 4
      %s16 = int_to_ptr.vmem [resolvable:$true] %s15
      %21 = dma.hbm_to_vmem [thread:$0]  %s0, 128, %s16, [#allocation4], 64, 64, 4
    $region5: #{tpu_custom_call.1} parent=1 // pred_fallthru
      _
    // Predicated region
    $region6: #{tpu_custom_call.1} parent=1 // pred_check
      _
    $region7: #{tpu_custom_call.1} parent=1 // pred_check_branch
      %23 = sbr.rel (0) target = $region9
    $region8: #{tpu_custom_call.1} parent=1 // pred_region
      %s25 = ssub.s32 1024, 1024
      %26 = vsyncadd [#allocation7], %s25
      %s27 = sshll.u32 [#allocation6], 4
      %s28 = int_to_ptr.vmem [resolvable:$true] %s27
      %33 = dma.hbm_to_vmem [thread:$0]  %s1, 1024, %s28, [#allocation7], 64, 64, 4
    $region9: #{tpu_custom_call.1} parent=1 // pred_fallthru
      _
    // Predicated region
    $region10: #{tpu_custom_call.1} parent=1 // pred_check
      _
    $region11: #{tpu_custom_call.1} parent=1 // pred_check_branch
      %35 = sbr.rel (0) target = $region13
    $region12: #{tpu_custom_call.1} parent=1 // pred_region
      %36 = dma.done [#allocation4], 128
    $region13: #{tpu_custom_call.1} parent=1 // pred_fallthru
      _
    // Predicated region
    $region14: #{tpu_custom_call.1} parent=1 // pred_check
      _
    $region15: #{tpu_custom_call.1} parent=1 // pred_check_branch
      %38 = sbr.rel (0) target = $region17
    $region16: #{tpu_custom_call.1} parent=1 // pred_region
      %39 = dma.done [#allocation7], 1024
    $region17: #{tpu_custom_call.1} parent=1 // pred_fallthru
      _
    %p41 = scmp.eq.s32.totalorder 0, 0
    // Predicated region
    $region18: #{tpu_custom_call.1} parent=1 // pred_check
      %p42 = pneg %p41
    $region19: #{tpu_custom_call.1} parent=1 // pred_check_branch
      %44 = sbr.rel (%p42) target = $region21
    $region20: #{tpu_custom_call.1} parent=1 // pred_region
      %45 = vst [vmem:[#allocation2] sm:$0xff] 0.0
      %46 = vst [vmem:[#allocation2 + $0x8] sm:$0xff] 0.0
    $region21: #{tpu_custom_call.1} parent=1 // pred_fallthru
      _
    %v47 = vld [vmem:[#allocation2] sm:$0xff]
    %v48 = vld [vmem:[#allocation2 + $0x8] sm:$0xff]
    %v49 = vld [vmem:[#allocation3] sm:$0xf]
    %v50 = vld [vmem:[#allocation3 + $0x4] sm:$0xf]
    %v51 = vld [vmem:[#allocation6] sm:$0xf]
    %v52 = vld [vmem:[#allocation6 + $0x4] sm:$0xf]
    %v53 = vld [vmem:[#allocation6 + $0x8] sm:$0xf]
    %v54 = vld [vmem:[#allocation6 + $0xc] sm:$0xf]
    %v55 = vld [vmem:[#allocation6 + $0x10] sm:$0xf]
    %v56 = vld [vmem:[#allocation6 + $0x14] sm:$0xf]
    %v57 = vld [vmem:[#allocation6 + $0x18] sm:$0xf]
    %v58 = vld [vmem:[#allocation6 + $0x1c] sm:$0xf]
    %v59 = vld [vmem:[#allocation6 + $0x20] sm:$0xf]
    %v60 = vld [vmem:[#allocation6 + $0x24] sm:$0xf]
    %v61 = vld [vmem:[#allocation6 + $0x28] sm:$0xf]
    %v62 = vld [vmem:[#allocation6 + $0x2c] sm:$0xf]
    %v63 = vld [vmem:[#allocation6 + $0x30] sm:$0xf]
    %v64 = vld [vmem:[#allocation6 + $0x34] sm:$0xf]
    %v65 = vld [vmem:[#allocation6 + $0x38] sm:$0xf]
    %v66 = vld [vmem:[#allocation6 + $0x3c] sm:$0xf]
    %v69 = vunpack.c.l.b16 %v49
    %v70 = vunpack.c.l.b16 %v50
    %v71 = vpack.c.b16 %v70, %v69
    %v89 = vunpack.c.l.b16 %v51
    %v90 = vunpack.c.l.b16 %v52
    %v91 = vunpack.c.l.b16 %v53
    %v92 = vunpack.c.l.b16 %v54
    %v93 = vunpack.c.l.b16 %v55
    %v94 = vunpack.c.l.b16 %v56
    %v95 = vunpack.c.l.b16 %v57
    %v96 = vunpack.c.l.b16 %v58
    %v97 = vunpack.c.l.b16 %v59
    %v98 = vunpack.c.l.b16 %v60
    %v99 = vunpack.c.l.b16 %v61
    %v100 = vunpack.c.l.b16 %v62
    %v101 = vunpack.c.l.b16 %v63
    %v102 = vunpack.c.l.b16 %v64
    %v103 = vunpack.c.l.b16 %v65
    %v104 = vunpack.c.l.b16 %v66
    %v105 = vpack.c.b16 %v90, %v89
    %v106 = vpack.c.b16 %v92, %v91
    %v107 = vpack.c.b16 %v94, %v93
    %v108 = vpack.c.b16 %v96, %v95
    %v109 = vpack.c.b16 %v98, %v97
    %v110 = vpack.c.b16 %v100, %v99
    %v111 = vpack.c.b16 %v102, %v101
    %v112 = vpack.c.b16 %v104, %v103
    %121 = vmatprep.subr.bf16.mxu0 0
    %122 = vmatpush1.bf16.msra.mxu0 %v105
    %123 = vmatprep.subr.bf16.mxu0 0
    %124 = vmatpush1.bf16.msra.mxu0 %v106
    %125 = vmatprep.subr.bf16.mxu0 0
    %126 = vmatpush1.bf16.msra.mxu0 %v107
    %127 = vmatprep.subr.bf16.mxu0 0
    %128 = vmatpush1.bf16.msra.mxu0 %v108
    %129 = vmatprep.subr.bf16.mxu0 0
    %130 = vmatpush1.bf16.msra.mxu0 %v109
    %131 = vmatprep.subr.bf16.mxu0 0
    %132 = vmatpush1.bf16.msra.mxu0 %v110
    %133 = vmatprep.subr.bf16.mxu0 0
    %134 = vmatpush1.bf16.msra.mxu0 %v111
    %135 = vmatprep.subr.bf16.mxu0 0
    %136 = vmatpush1.bf16.msra.mxu0 %v112
    %137 = vmatprep.subr.bf16.mxu0 0
    %138 = vmatpush1.bf16.msra.mxu0 0
    %139 = vmatprep.subr.bf16.mxu0 0
    %140 = vmatpush1.bf16.msra.mxu0 0
    %141 = vmatprep.subr.bf16.mxu0 0
    %142 = vmatpush1.bf16.msra.mxu0 0
    %143 = vmatprep.subr.bf16.mxu0 0
    %144 = vmatpush1.bf16.msra.mxu0 0
    %145 = vmatprep.subr.bf16.mxu0 0
    %146 = vmatpush1.bf16.msra.mxu0 0
    %147 = vmatprep.subr.bf16.mxu0 0
    %148 = vmatpush1.bf16.msra.mxu0 0
    %149 = vmatprep.subr.bf16.mxu0 0
    %150 = vmatpush1.bf16.msra.mxu0 0
    %151 = vmatprep.subr.bf16.mxu0 0
    %152 = vmatpush1.bf16.msra.mxu0 0
    %153 = vmatprep.mubr.bf16.mxu0 0
    %154 = vmatmul.mubr.bf16.gmra.mrb[0].mxu0 %v71
    %v155 = vpop.f32.mrb[0].mxu0
    %v156 = vadd.f32 0.0, %v155
    %v157 = vpop.f32.mrb[0].mxu0
    %v158 = vpop.f32.mrb[0].mxu0
    %v159 = vadd.f32 0.0, %v158
    %v160 = vpop.f32.mrb[0].mxu0
    %161 = vdwg.mxu0
    %v162 = vadd.f32 %v47, %v156
    %v163 = vadd.f32 %v48, %v159
    %164 = vst [vmem:[#allocation2] sm:$0xff] %v162
    %165 = vst [vmem:[#allocation2 + $0x8] sm:$0xff] %v163
    // Predicated region
    $region22: #{tpu_custom_call.1} parent=1 // pred_check
      %p166 = pneg %p41
    $region23: #{tpu_custom_call.1} parent=1 // pred_check_branch
      %168 = sbr.rel (%p166) target = $region25
    $region24: #{tpu_custom_call.1} parent=1 // pred_region
      %v169 = vld [vmem:[#allocation2] sm:$0xff]
      %v170 = vld [vmem:[#allocation2 + $0x8] sm:$0xff]
      %v171 = vpack.c.bf16 %v170, %v169
      %v173 = vunpack.c.l.b16 %v171
      %v174 = vunpack.c.h.b16 %v171
      %v175 = vpack.c.b16 %v173, %v173
      %v176 = vpack.c.b16 %v174, %v174
      %179 = vst [vmem:[#allocation8] sm:$0xf] %v175
      %180 = vst [vmem:[#allocation8 + $0x4] sm:$0xf] %v176
    $region25: #{tpu_custom_call.1} parent=1 // pred_fallthru
      _
    // Predicated region
    $region26: #{tpu_custom_call.1} parent=1 // pred_check
      _
    $region27: #{tpu_custom_call.1} parent=1 // pred_check_branch
      %182 = sbr.rel (0) target = $region29
    $region28: #{tpu_custom_call.1} parent=1 // pred_region
      %s184 = ssub.s32 128, 128
      %185 = vsyncadd [#allocation5], %s184
      %s186 = sshll.u32 [#allocation8], 4
      %s187 = int_to_ptr.vmem [resolvable:$true] %s186
      %192 = dma.vmem_to_hbm [thread:$0]  %s187, 128, %s2, [#allocation5], 64, 64, 4
    $region29: #{tpu_custom_call.1} parent=1 // pred_fallthru
      _
    // Predicated region
    $region30: #{tpu_custom_call.1} parent=1 // pred_check
      _
    $region31: #{tpu_custom_call.1} parent=1 // pred_check_branch
      %194 = sbr.rel (0) target = $region33
    $region32: #{tpu_custom_call.1} parent=1 // pred_region
      %195 = dma.done [#allocation5], 128
    $region33: #{tpu_custom_call.1} parent=1 // pred_fallthru
      _
    %196 = vsyncpa [#allocation4], 1
    %197 = vsyncpa [#allocation7], 1
    %198 = vsyncpa [#allocation5], 1

</llo_original>
